<compile_context>
chip_gen: v7x
topology: tpu7x:2x2x1
jax: 0.10.0
libtpu: 0.0.40
codegen_flags: <defaults>
</compile_context>

<pallas_src>
import functools

import jax
import jax.numpy as jnp
from jax import lax
from jax.experimental import pallas as pl
from jax.experimental.pallas import tpu as pltpu

PAD = 2  # SpherePad / SphereTrim width


def residual_block_kernel(x_ref, w1_ref, w2_ref, w3_ref, pp_ref, o_ref, *, H, W, p):
    """One batch image per grid step.

    x_ref : (1, C, H*W)     activations, flattened spatial on the lane axis
    w1_ref: (Cmid, C)       conv1 1x1 weight (O, I)
    w2_ref: (Cmid, 9*Cmid)  conv2 3x3 weight reshaped to (O, KH*KW*I)
    w3_ref: (C, Cmid)       conv3 1x1 weight (O, I)
    pp_ref: (4*Cmid+C, 1)   packed [b1; a1; b2; a2; b3] column
    o_ref : (1, C, H*W)
    """
    C = x_ref.shape[1]
    HW = H * W
    Cmid = w1_ref.shape[0]
    Hi, Wi = H - 2 * p, W - 2 * p          # interior (wrap-period) sizes

    x = x_ref[0]                           # (C, HW) f32

    # lane index -> (row, col) planes, shape (1, HW)
    lane = lax.broadcasted_iota(jnp.int32, (1, HW), 1)
    if W & (W - 1) == 0:                   # power-of-two width: cheap bit ops
        row = lane >> (W.bit_length() - 1)
        col = lane & (W - 1)
    else:                                  # general fallback (untaken in tests)
        row = lane // W
        col = lane - row * W

    def shift_lanes(v, d):
        # out[:, l] = v[:, (l + d) mod HW].  Callers only consume lanes where
        # l + d stays inside the image; the wrapped lanes are masked away.
        return pltpu.roll(v, (-d) % HW, axis=1)

    # ---- SpherePad(p): wrap the interior into the p-wide border (rolls+masks)
    c_lo, c_hi = col < p, col >= W - p
    r_lo, r_hi = row < p, row >= H - p
    xw = jnp.where(c_lo, shift_lanes(x, Wi),
                   jnp.where(c_hi, shift_lanes(x, -Wi), x))
    xsp = jnp.where(r_lo, shift_lanes(xw, Hi * W),
                    jnp.where(r_hi, shift_lanes(xw, -Hi * W), xw))

    # packed per-channel params -> (k, 1) columns broadcasting over lanes
    pp = pp_ref[...]
    b1 = pp[0 * Cmid:1 * Cmid]
    a1 = pp[1 * Cmid:2 * Cmid]
    b2 = pp[2 * Cmid:3 * Cmid]
    a2 = pp[3 * Cmid:4 * Cmid]
    b3 = pp[4 * Cmid:4 * Cmid + C]

    # ---- conv1 (1x1) + PReLU : (Cmid, C) @ (C, HW)
    h1 = jnp.dot(w1_ref[...], xsp, preferred_element_type=jnp.float32) + b1
    h1 = jnp.where(h1 > 0, h1, a1 * h1)                       # (Cmid, HW)

    # ---- conv2 (3x3, stride 1, zero pad 1): im2col taps -> ONE fused matmul
    taps = []
    for kh in range(3):
        for kw in range(3):
            dh, dw = kh - 1, kw - 1
            t = h1 if (dh == 0 and dw == 0) else shift_lanes(h1, dh * W + dw)
            conds = []
            if dh == -1:
                conds.append(row >= 1)
            if dh == 1:
                conds.append(row < H - 1)
            if dw == -1:
                conds.append(col >= 1)
            if dw == 1:
                conds.append(col < W - 1)
            if conds:
                valid = conds[0]
                for cnd in conds[1:]:
                    valid = valid & cnd
                t = jnp.where(valid, t, 0.0)
            taps.append(t)
    taps = jnp.concatenate(taps, axis=0)                      # (9*Cmid, HW)
    h2 = jnp.dot(w2_ref[...], taps, preferred_element_type=jnp.float32) + b2
    h2 = jnp.where(h2 > 0, h2, a2 * h2)                       # (Cmid, HW)

    # ---- conv3 (1x1) + residual + SphereTrim fused into ONE dense store
    h3 = jnp.dot(w3_ref[...], h2, preferred_element_type=jnp.float32) + b3
    keep = jnp.logical_not(r_lo | r_hi | c_lo | c_hi)         # interior mask
    o_ref[0] = jnp.where(keep, x + h3, 0.0)


def residual_block(x_nchw, kernel_params, *, pad=PAD):
    """x_nchw: (B, C, H, W) float32. Returns (B, C, H, W)."""
    B, C, H, W = x_nchw.shape
    HW = H * W                       # 256 here: multiple of 128 -> lane-dense I/O
    w1k, w2k, w3k, pp = kernel_params

    x2 = x_nchw.reshape(B, C, HW)    # free: NCHW already is the HBM layout

    kern = functools.partial(residual_block_kernel, H=H, W=W, p=pad)

    def full_spec(a):
        nd = a.ndim
        return pl.BlockSpec(a.shape, lambda b, _n=nd: (0,) * _n)

    out2 = pl.pallas_call(
        kern,
        out_shape=jax.ShapeDtypeStruct((B, C, HW), jnp.float32),
        grid_spec=pltpu.PrefetchScalarGridSpec(
            num_scalar_prefetch=0,
            grid=(B,),               # batch axis; B=2 -> shards across v7x's 2 TCs
            in_specs=[
                pl.BlockSpec((1, C, HW), lambda b: (b, 0, 0)),
                full_spec(w1k), full_spec(w2k), full_spec(w3k), full_spec(pp),
            ],
            out_specs=pl.BlockSpec((1, C, HW), lambda b: (b, 0, 0)),
        ),
        compiler_params=pltpu.CompilerParams(
            dimension_semantics=("parallel",),
            # explicit VMEM budget: whole-image blocks here are ~100 KiB, far
            # under the tightest (v7x) budget.  At production sizes, tile H
            # with a 1-row halo instead of whole-image blocks.
            vmem_limit_bytes=32 * 1024 * 1024,
        ),
    )(x2, w1k, w2k, w3k, pp)

    return out2.reshape(B, C, H, W)


# --------------------------- parameters & reference ---------------------------

def init_params(key, C):
    """PyTorch-shaped parameters, deterministic."""
    Cmid = C // 2
    ks = jax.random.split(key, 6)
    w1 = 0.1 * jax.random.normal(ks[0], (Cmid, C), jnp.float32)           # (O,I)
    b1 = 0.1 * jax.random.normal(ks[1], (Cmid,), jnp.float32)
    w2 = 0.1 * jax.random.normal(ks[2], (Cmid, Cmid, 3, 3), jnp.float32)  # OIHW
    b2 = 0.1 * jax.random.normal(ks[3], (Cmid,), jnp.float32)
    w3 = 0.1 * jax.random.normal(ks[4], (C, Cmid), jnp.float32)           # (O,I)
    b3 = 0.1 * jax.random.normal(ks[5], (C,), jnp.float32)
    a1 = jnp.full((Cmid,), 0.25, jnp.float32)   # nn.PReLU default init
    a2 = jnp.full((Cmid,), 0.25, jnp.float32)
    return w1, b1, a1, w2, b2, a2, w3, b3


def to_kernel_params(params, C):
    Cmid = C // 2
    w1, b1, a1, w2, b2, a2, w3, b3 = params
    w2m = jnp.transpose(w2, (0, 2, 3, 1)).reshape(Cmid, 9 * Cmid)  # (O, KH*KW*I)
    pp = jnp.concatenate([b1, a1, b2, a2, b3]).reshape(-1, 1)      # packed column
    return (w1, w2m, w3, pp)


def ref_forward(x, params):
    """Pure-JAX NCHW reference with the same SpherePad/SphereTrim model."""
    w1, b1, a1, w2, b2, a2, w3, b3 = params
    p = PAD

    def sphere_pad(t):
        inner = t[:, :, p:-p, p:-p]
        tw = jnp.concatenate([inner[..., -p:], inner, inner[..., :p]], axis=3)
        return jnp.concatenate([tw[:, :, -p:, :], tw, tw[:, :, :p, :]], axis=2)

    def prelu(t, a):
        return jnp.where(t > 0, t, a[None, :, None, None] * t)

    y = sphere_pad(x)
    y = jnp.einsum('bchw,oc->bohw', y, w1) + b1[None, :, None, None]
    y = prelu(y, a1)
    y = lax.conv_general_dilated(y, w2, (1, 1), [(1, 1), (1, 1)],
                                 dimension_numbers=('NCHW', 'OIHW', 'NCHW'))
    y = y + b2[None, :, None, None]
    y = prelu(y, a2)
    y = jnp.einsum('bchw,oc->bohw', y, w3) + b3[None, :, None, None]
    out = x + y
    B, C, H, W = x.shape
    row = jnp.arange(H)[None, None, :, None]
    col = jnp.arange(W)[None, None, None, :]
    keep = (row >= p) & (row < H - p) & (col >= p) & (col < W - p)
    return jnp.where(keep, out, 0.0)


if __name__ == "__main__":
    key = jax.random.PRNGKey(0)
    B, C, H, W = 2, 8, 16, 16
    kx, kp = jax.random.split(key)
    x = jax.random.normal(kx, (B, C, H, W), jnp.float32)

    params = init_params(kp, C)
    kparams = to_kernel_params(params, C)

    out = residual_block(x, kparams)
    out = jax.block_until_ready(out)

    ref = ref_forward(x, params)
    assert out.shape == x.shape, (out.shape, x.shape)
    max_err = float(jnp.max(jnp.abs(out - ref)))
    assert jnp.allclose(out, ref, atol=1e-4, rtol=1e-4), f"max_err={max_err}"

    print("KERNEL_OK")
</pallas_src>

<mosaic_0001>
module attributes {stable_mosaic.version = 11 : i64} {
  func.func @residual_block_kernel(%arg0: i32, %arg1: memref<1x8x256xf32, #tpu.memory_space<vmem>>, %arg2: memref<4x8xf32, #tpu.memory_space<vmem>>, %arg3: memref<4x36xf32, #tpu.memory_space<vmem>>, %arg4: memref<8x4xf32, #tpu.memory_space<vmem>>, %arg5: memref<24x1xf32, #tpu.memory_space<vmem>>, %arg6: memref<1x8x256xf32, #tpu.memory_space<vmem>>) attributes {dimension_semantics = [#tpu.dimension_semantics<parallel>], iteration_bounds = array<i64: 2>, scalar_prefetch = 0 : i64, scratch_operands = 0 : i64, tpu.core_type = #tpu.core_type<tc>, window_params = [{transform_indices = @transform_0, window_bounds = array<i64: 1, 8, 256>}, {pipeline_mode = #tpu.pipeline_mode<synchronous>, transform_indices = @transform_1, window_bounds = array<i64: 4, 8>}, {pipeline_mode = #tpu.pipeline_mode<synchronous>, transform_indices = @transform_2, window_bounds = array<i64: 4, 36>}, {pipeline_mode = #tpu.pipeline_mode<synchronous>, transform_indices = @transform_3, window_bounds = array<i64: 8, 4>}, {pipeline_mode = #tpu.pipeline_mode<synchronous>, transform_indices = @transform_4, window_bounds = array<i64: 24, 1>}, {transform_indices = @transform_5, window_bounds = array<i64: 1, 8, 256>}]} {
    %c0 = arith.constant 0 : index
    %c0_0 = arith.constant 0 : index
    %c0_1 = arith.constant 0 : index
    %0 = vector.load %arg1[%c0, %c0_0, %c0_1] : memref<1x8x256xf32, #tpu.memory_space<vmem>>, vector<1x8x256xf32>
    %1 = vector.shape_cast %0 : vector<1x8x256xf32> to vector<8x256xf32>
    %2 = tpu.iota {dimensions = array<i32: 1>} : vector<1x256xi32>
    %c4_i32 = arith.constant 4 : i32
    %3 = vector.broadcast %c4_i32 : i32 to vector<1x256xi32>
    %4 = arith.shrsi %2, %3 : vector<1x256xi32>
    %c15_i32 = arith.constant 15 : i32
    %5 = vector.broadcast %c15_i32 : i32 to vector<1x256xi32>
    %6 = arith.andi %2, %5 : vector<1x256xi32>
    %c2_i32 = arith.constant 2 : i32
    %7 = vector.broadcast %c2_i32 : i32 to vector<1x256xi32>
    %8 = arith.cmpi slt, %6, %7 : vector<1x256xi32>
    %c14_i32 = arith.constant 14 : i32
    %9 = vector.broadcast %c14_i32 : i32 to vector<1x256xi32>
    %10 = arith.cmpi sge, %6, %9 : vector<1x256xi32>
    %c2_i32_2 = arith.constant 2 : i32
    %11 = vector.broadcast %c2_i32_2 : i32 to vector<1x256xi32>
    %12 = arith.cmpi slt, %4, %11 : vector<1x256xi32>
    %c14_i32_3 = arith.constant 14 : i32
    %13 = vector.broadcast %c14_i32_3 : i32 to vector<1x256xi32>
    %14 = arith.cmpi sge, %4, %13 : vector<1x256xi32>
    %c244_i32 = arith.constant 244 : i32
    %15 = tpu.dynamic_rotate %1 by %c244_i32 dim 1 : vector<8x256xf32>, i32 -> vector<8x256xf32>
    %c12_i32 = arith.constant 12 : i32
    %16 = tpu.dynamic_rotate %1 by %c12_i32 dim 1 : vector<8x256xf32>, i32 -> vector<8x256xf32>
    %17 = vector.shape_cast %10 : vector<1x256xi1> to vector<1x256xi1>
    %18 = vector.broadcast %17 : vector<1x256xi1> to vector<8x256xi1>
    %19 = arith.select %18, %16, %1 : vector<8x256xi1>, vector<8x256xf32>
    %20 = vector.shape_cast %8 : vector<1x256xi1> to vector<1x256xi1>
    %21 = vector.broadcast %20 : vector<1x256xi1> to vector<8x256xi1>
    %22 = arith.select %21, %15, %19 : vector<8x256xi1>, vector<8x256xf32>
    %c64_i32 = arith.constant 64 : i32
    %23 = tpu.dynamic_rotate %22 by %c64_i32 dim 1 : vector<8x256xf32>, i32 -> vector<8x256xf32>
    %c192_i32 = arith.constant 192 : i32
    %24 = tpu.dynamic_rotate %22 by %c192_i32 dim 1 : vector<8x256xf32>, i32 -> vector<8x256xf32>
    %25 = vector.shape_cast %14 : vector<1x256xi1> to vector<1x256xi1>
    %26 = vector.broadcast %25 : vector<1x256xi1> to vector<8x256xi1>
    %27 = arith.select %26, %24, %22 : vector<8x256xi1>, vector<8x256xf32>
    %28 = vector.shape_cast %12 : vector<1x256xi1> to vector<1x256xi1>
    %29 = vector.broadcast %28 : vector<1x256xi1> to vector<8x256xi1>
    %30 = arith.select %29, %23, %27 : vector<8x256xi1>, vector<8x256xf32>
    %c0_4 = arith.constant 0 : index
    %c0_5 = arith.constant 0 : index
    %31 = vector.load %arg5[%c0_4, %c0_5] : memref<24x1xf32, #tpu.memory_space<vmem>>, vector<24x1xf32>
    %32 = vector.extract_strided_slice %31 {offsets = [0, 0], sizes = [4, 1], strides = [1, 1]} : vector<24x1xf32> to vector<4x1xf32>
    %33 = vector.extract_strided_slice %31 {offsets = [4, 0], sizes = [4, 1], strides = [1, 1]} : vector<24x1xf32> to vector<4x1xf32>
    %34 = vector.extract_strided_slice %31 {offsets = [8, 0], sizes = [4, 1], strides = [1, 1]} : vector<24x1xf32> to vector<4x1xf32>
    %35 = vector.extract_strided_slice %31 {offsets = [12, 0], sizes = [4, 1], strides = [1, 1]} : vector<24x1xf32> to vector<4x1xf32>
    %36 = vector.extract_strided_slice %31 {offsets = [16, 0], sizes = [8, 1], strides = [1, 1]} : vector<24x1xf32> to vector<8x1xf32>
    %c0_6 = arith.constant 0 : index
    %c0_7 = arith.constant 0 : index
    %37 = vector.load %arg2[%c0_6, %c0_7] : memref<4x8xf32, #tpu.memory_space<vmem>>, vector<4x8xf32>
    %cst = arith.constant dense<0.000000e+00> : vector<4x256xf32>
    %38 = tpu.matmul %37, %30, %cst {dimension_numbers = #tpu.dot_dimension_numbers<[1], [0], [0], [1], [0, 0, 1, 1], [], []>} : vector<4x8xf32>, vector<8x256xf32>, vector<4x256xf32> -> vector<4x256xf32>
    %39 = vector.broadcast %32 : vector<4x1xf32> to vector<4x256xf32>
    %40 = arith.addf %38, %39 : vector<4x256xf32>
    %cst_8 = arith.constant 0.000000e+00 : f32
    %41 = vector.broadcast %cst_8 : f32 to vector<4x256xf32>
    %42 = arith.cmpf ogt, %40, %41 : vector<4x256xf32>
    %43 = vector.broadcast %33 : vector<4x1xf32> to vector<4x256xf32>
    %44 = arith.mulf %43, %40 : vector<4x256xf32>
    %45 = arith.select %42, %40, %44 : vector<4x256xi1>, vector<4x256xf32>
    %c17_i32 = arith.constant 17 : i32
    %46 = tpu.dynamic_rotate %45 by %c17_i32 dim 1 : vector<4x256xf32>, i32 -> vector<4x256xf32>
    %c1_i32 = arith.constant 1 : i32
    %47 = vector.broadcast %c1_i32 : i32 to vector<1x256xi32>
    %48 = arith.cmpi sge, %4, %47 : vector<1x256xi32>
    %c1_i32_9 = arith.constant 1 : i32
    %49 = vector.broadcast %c1_i32_9 : i32 to vector<1x256xi32>
    %50 = arith.cmpi sge, %6, %49 : vector<1x256xi32>
    %51 = arith.andi %48, %50 : vector<1x256xi1>
    %cst_10 = arith.constant 0.000000e+00 : f32
    %52 = vector.shape_cast %51 : vector<1x256xi1> to vector<1x256xi1>
    %53 = vector.broadcast %52 : vector<1x256xi1> to vector<4x256xi1>
    %54 = vector.broadcast %cst_10 : f32 to vector<4x256xf32>
    %55 = arith.select %53, %46, %54 : vector<4x256xi1>, vector<4x256xf32>
    %c16_i32 = arith.constant 16 : i32
    %56 = tpu.dynamic_rotate %45 by %c16_i32 dim 1 : vector<4x256xf32>, i32 -> vector<4x256xf32>
    %c1_i32_11 = arith.constant 1 : i32
    %57 = vector.broadcast %c1_i32_11 : i32 to vector<1x256xi32>
    %58 = arith.cmpi sge, %4, %57 : vector<1x256xi32>
    %cst_12 = arith.constant 0.000000e+00 : f32
    %59 = vector.shape_cast %58 : vector<1x256xi1> to vector<1x256xi1>
    %60 = vector.broadcast %59 : vector<1x256xi1> to vector<4x256xi1>
    %61 = vector.broadcast %cst_12 : f32 to vector<4x256xf32>
    %62 = arith.select %60, %56, %61 : vector<4x256xi1>, vector<4x256xf32>
    %c15_i32_13 = arith.constant 15 : i32
    %63 = tpu.dynamic_rotate %45 by %c15_i32_13 dim 1 : vector<4x256xf32>, i32 -> vector<4x256xf32>
    %c1_i32_14 = arith.constant 1 : i32
    %64 = vector.broadcast %c1_i32_14 : i32 to vector<1x256xi32>
    %65 = arith.cmpi sge, %4, %64 : vector<1x256xi32>
    %c15_i32_15 = arith.constant 15 : i32
    %66 = vector.broadcast %c15_i32_15 : i32 to vector<1x256xi32>
    %67 = arith.cmpi slt, %6, %66 : vector<1x256xi32>
    %68 = arith.andi %65, %67 : vector<1x256xi1>
    %cst_16 = arith.constant 0.000000e+00 : f32
    %69 = vector.shape_cast %68 : vector<1x256xi1> to vector<1x256xi1>
    %70 = vector.broadcast %69 : vector<1x256xi1> to vector<4x256xi1>
    %71 = vector.broadcast %cst_16 : f32 to vector<4x256xf32>
    %72 = arith.select %70, %63, %71 : vector<4x256xi1>, vector<4x256xf32>
    %c1_i32_17 = arith.constant 1 : i32
    %73 = tpu.dynamic_rotate %45 by %c1_i32_17 dim 1 : vector<4x256xf32>, i32 -> vector<4x256xf32>
    %c1_i32_18 = arith.constant 1 : i32
    %74 = vector.broadcast %c1_i32_18 : i32 to vector<1x256xi32>
    %75 = arith.cmpi sge, %6, %74 : vector<1x256xi32>
    %cst_19 = arith.constant 0.000000e+00 : f32
    %76 = vector.shape_cast %75 : vector<1x256xi1> to vector<1x256xi1>
    %77 = vector.broadcast %76 : vector<1x256xi1> to vector<4x256xi1>
    %78 = vector.broadcast %cst_19 : f32 to vector<4x256xf32>
    %79 = arith.select %77, %73, %78 : vector<4x256xi1>, vector<4x256xf32>
    %c255_i32 = arith.constant 255 : i32
    %80 = tpu.dynamic_rotate %45 by %c255_i32 dim 1 : vector<4x256xf32>, i32 -> vector<4x256xf32>
    %c15_i32_20 = arith.constant 15 : i32
    %81 = vector.broadcast %c15_i32_20 : i32 to vector<1x256xi32>
    %82 = arith.cmpi slt, %6, %81 : vector<1x256xi32>
    %cst_21 = arith.constant 0.000000e+00 : f32
    %83 = vector.shape_cast %82 : vector<1x256xi1> to vector<1x256xi1>
    %84 = vector.broadcast %83 : vector<1x256xi1> to vector<4x256xi1>
    %85 = vector.broadcast %cst_21 : f32 to vector<4x256xf32>
    %86 = arith.select %84, %80, %85 : vector<4x256xi1>, vector<4x256xf32>
    %c241_i32 = arith.constant 241 : i32
    %87 = tpu.dynamic_rotate %45 by %c241_i32 dim 1 : vector<4x256xf32>, i32 -> vector<4x256xf32>
    %c15_i32_22 = arith.constant 15 : i32
    %88 = vector.broadcast %c15_i32_22 : i32 to vector<1x256xi32>
    %89 = arith.cmpi slt, %4, %88 : vector<1x256xi32>
    %c1_i32_23 = arith.constant 1 : i32
    %90 = vector.broadcast %c1_i32_23 : i32 to vector<1x256xi32>
    %91 = arith.cmpi sge, %6, %90 : vector<1x256xi32>
    %92 = arith.andi %89, %91 : vector<1x256xi1>
    %cst_24 = arith.constant 0.000000e+00 : f32
    %93 = vector.shape_cast %92 : vector<1x256xi1> to vector<1x256xi1>
    %94 = vector.broadcast %93 : vector<1x256xi1> to vector<4x256xi1>
    %95 = vector.broadcast %cst_24 : f32 to vector<4x256xf32>
    %96 = arith.select %94, %87, %95 : vector<4x256xi1>, vector<4x256xf32>
    %c240_i32 = arith.constant 240 : i32
    %97 = tpu.dynamic_rotate %45 by %c240_i32 dim 1 : vector<4x256xf32>, i32 -> vector<4x256xf32>
    %c15_i32_25 = arith.constant 15 : i32
    %98 = vector.broadcast %c15_i32_25 : i32 to vector<1x256xi32>
    %99 = arith.cmpi slt, %4, %98 : vector<1x256xi32>
    %cst_26 = arith.constant 0.000000e+00 : f32
    %100 = vector.shape_cast %99 : vector<1x256xi1> to vector<1x256xi1>
    %101 = vector.broadcast %100 : vector<1x256xi1> to vector<4x256xi1>
    %102 = vector.broadcast %cst_26 : f32 to vector<4x256xf32>
    %103 = arith.select %101, %97, %102 : vector<4x256xi1>, vector<4x256xf32>
    %c239_i32 = arith.constant 239 : i32
    %104 = tpu.dynamic_rotate %45 by %c239_i32 dim 1 : vector<4x256xf32>, i32 -> vector<4x256xf32>
    %c15_i32_27 = arith.constant 15 : i32
    %105 = vector.broadcast %c15_i32_27 : i32 to vector<1x256xi32>
    %106 = arith.cmpi slt, %4, %105 : vector<1x256xi32>
    %c15_i32_28 = arith.constant 15 : i32
    %107 = vector.broadcast %c15_i32_28 : i32 to vector<1x256xi32>
    %108 = arith.cmpi slt, %6, %107 : vector<1x256xi32>
    %109 = arith.andi %106, %108 : vector<1x256xi1>
    %cst_29 = arith.constant 0.000000e+00 : f32
    %110 = vector.shape_cast %109 : vector<1x256xi1> to vector<1x256xi1>
    %111 = vector.broadcast %110 : vector<1x256xi1> to vector<4x256xi1>
    %112 = vector.broadcast %cst_29 : f32 to vector<4x256xf32>
    %113 = arith.select %111, %104, %112 : vector<4x256xi1>, vector<4x256xf32>
    %114 = tpu.concatenate %55, %62, %72, %79, %45, %86, %96, %103, %113 in 0 : vector<4x256xf32>, vector<4x256xf32>, vector<4x256xf32>, vector<4x256xf32>, vector<4x256xf32>, vector<4x256xf32>, vector<4x256xf32>, vector<4x256xf32>, vector<4x256xf32> -> vector<36x256xf32>
    %c0_30 = arith.constant 0 : index
    %c0_31 = arith.constant 0 : index
    %115 = vector.load %arg3[%c0_30, %c0_31] : memref<4x36xf32, #tpu.memory_space<vmem>>, vector<4x36xf32>
    %cst_32 = arith.constant dense<0.000000e+00> : vector<4x256xf32>
    %116 = tpu.matmul %115, %114, %cst_32 {dimension_numbers = #tpu.dot_dimension_numbers<[1], [0], [0], [1], [0, 0, 1, 1], [], []>} : vector<4x36xf32>, vector<36x256xf32>, vector<4x256xf32> -> vector<4x256xf32>
    %117 = vector.broadcast %34 : vector<4x1xf32> to vector<4x256xf32>
    %118 = arith.addf %116, %117 : vector<4x256xf32>
    %cst_33 = arith.constant 0.000000e+00 : f32
    %119 = vector.broadcast %cst_33 : f32 to vector<4x256xf32>
    %120 = arith.cmpf ogt, %118, %119 : vector<4x256xf32>
    %121 = vector.broadcast %35 : vector<4x1xf32> to vector<4x256xf32>
    %122 = arith.mulf %121, %118 : vector<4x256xf32>
    %123 = arith.select %120, %118, %122 : vector<4x256xi1>, vector<4x256xf32>
    %c0_34 = arith.constant 0 : index
    %c0_35 = arith.constant 0 : index
    %124 = vector.load %arg4[%c0_34, %c0_35] : memref<8x4xf32, #tpu.memory_space<vmem>>, vector<8x4xf32>
    %cst_36 = arith.constant dense<0.000000e+00> : vector<8x256xf32>
    %125 = tpu.matmul %124, %123, %cst_36 {dimension_numbers = #tpu.dot_dimension_numbers<[1], [0], [0], [1], [0, 0, 1, 1], [], []>} : vector<8x4xf32>, vector<4x256xf32>, vector<8x256xf32> -> vector<8x256xf32>
    %126 = vector.broadcast %36 : vector<8x1xf32> to vector<8x256xf32>
    %127 = arith.addf %125, %126 : vector<8x256xf32>
    %128 = arith.ori %12, %14 : vector<1x256xi1>
    %129 = arith.ori %128, %8 : vector<1x256xi1>
    %130 = arith.ori %129, %10 : vector<1x256xi1>
    %cst_37 = arith.constant dense<true> : vector<1x256xi1>
    %131 = arith.xori %130, %cst_37 : vector<1x256xi1>
    %132 = arith.addf %1, %127 : vector<8x256xf32>
    %cst_38 = arith.constant 0.000000e+00 : f32
    %133 = vector.shape_cast %131 : vector<1x256xi1> to vector<1x256xi1>
    %134 = vector.broadcast %133 : vector<1x256xi1> to vector<8x256xi1>
    %135 = vector.broadcast %cst_38 : f32 to vector<8x256xf32>
    %136 = arith.select %134, %132, %135 : vector<8x256xi1>, vector<8x256xf32>
    %c0_39 = arith.constant 0 : index
    %c0_40 = arith.constant 0 : index
    %c0_41 = arith.constant 0 : index
    %137 = vector.load %arg6[%c0_39, %c0_40, %c0_41] : memref<1x8x256xf32, #tpu.memory_space<vmem>>, vector<1x8x256xf32>
    %138 = vector.shape_cast %137 : vector<1x8x256xf32> to vector<8x256xf32>
    %139 = vector.shape_cast %136 : vector<8x256xf32> to vector<1x8x256xf32>
    tpu.vector_store %arg6[%c0_39, %c0_40, %c0_41], %139 {strides = array<i32>} : memref<1x8x256xf32, #tpu.memory_space<vmem>>, vector<1x8x256xf32>,
    return
  }
  func.func @transform_0(%arg0: i32) -> (i32, i32, i32) {
    %c0_i32 = arith.constant 0 : i32
    %c0_i32_0 = arith.constant 0 : i32
    %c0_i32_1 = arith.constant 0 : i32
    return %arg0, %c0_i32, %c0_i32_0 : i32, i32, i32
  }
  func.func @transform_1(%arg0: i32) -> (i32, i32) {
    %c0_i32 = arith.constant 0 : i32
    %c0_i32_0 = arith.constant 0 : i32
    %c0_i32_1 = arith.constant 0 : i32
    return %c0_i32, %c0_i32_0 : i32, i32
  }
  func.func @transform_2(%arg0: i32) -> (i32, i32) {
    %c0_i32 = arith.constant 0 : i32
    %c0_i32_0 = arith.constant 0 : i32
    %c0_i32_1 = arith.constant 0 : i32
    return %c0_i32, %c0_i32_0 : i32, i32
  }
  func.func @transform_3(%arg0: i32) -> (i32, i32) {
    %c0_i32 = arith.constant 0 : i32
    %c0_i32_0 = arith.constant 0 : i32
    %c0_i32_1 = arith.constant 0 : i32
    return %c0_i32, %c0_i32_0 : i32, i32
  }
  func.func @transform_4(%arg0: i32) -> (i32, i32) {
    %c0_i32 = arith.constant 0 : i32
    %c0_i32_0 = arith.constant 0 : i32
    %c0_i32_1 = arith.constant 0 : i32
    return %c0_i32, %c0_i32_0 : i32, i32
  }
  func.func @transform_5(%arg0: i32) -> (i32, i32, i32) {
    %c0_i32 = arith.constant 0 : i32
    %c0_i32_0 = arith.constant 0 : i32
    %c0_i32_1 = arith.constant 0 : i32
    return %arg0, %c0_i32, %c0_i32_0 : i32, i32, i32
  }
}

</mosaic_0001>

<llo_original>
// kernel: tpu_custom_call.1
$region0: #{tpu_custom_call.1}
  #allocation0 [shape = 'u32[]', space=smem, size = 0x4, offset = 0x4, fixed_abs, tag = 'smem constant byte address 0x4 - core index']
  #allocation1 [shape = 'u32[144,128]{1,0:T(1,128)}', space=vmem, size = 0x12000, scoped, tag = 'internal scratch']
  %s0 = inlined_call_operand.vmem [shape: f32[2,8,256], index: 0, kind: input, shape index: {}]
  %s1 = inlined_call_operand.vmem [shape: f32[4,8], index: 1, kind: input, shape index: {}]
  %s2 = inlined_call_operand.vmem [shape: f32[4,36], index: 2, kind: input, shape index: {}]
  %s3 = inlined_call_operand.vmem [shape: f32[8,4], index: 3, kind: input, shape index: {}]
  %s4 = inlined_call_operand.vmem [shape: f32[24,1], index: 4, kind: input, shape index: {}]
  %s5 = inlined_call_operand.hbm [shape: f32[2,8,256], index: 5, kind: output, shape index: {}]
  %s6 = sld [smem:[#allocation0]]
  $region53: #{tpu_custom_call.1} parent=0
    _
  %s8 = ssub.s32 1, %s6
  %s9 = scalar_select 0, %s8, %s6
  $region1: #{tpu_custom_call.1} parent=0
    #allocation2 [shape = 'u8[16384]{0}', space=vmem, size = 0x4000, scoped, tag = 'output window, operand 0']
    #allocation3 [shape = 's32[2]{0}', space=sflag, size = 0x8, scoped, tag = 'scoped memory for tpu_custom_call.1']
    %10 = vsyncpa [#allocation3], 0
    %s11 = scalar_lea.sflag [#allocation3], 1
    %12 = vsyncpa %s11, 0
    loop: start=0, step=1, limit=4
    $region2: #{tpu_custom_call.1} parent=1 // loop_pre_header
      _
    $region3: #{tpu_custom_call.1} parent=1 // loop_header
      %s14 = sphi 0, %s18
      %p15 = scmp.ge.s32.totalorder %s14, 4
      %s24 = sphi 0, %s26
      %s27 = sphi 0, %s24
      %s28 = sphi 0, %s27
      %s44 = sphi 0, %s28
      %s48 = sphi 0, %s48
      %s50 = sphi 0, %s48
      %s51 = sphi 0, %s50
      %s65 = sphi 0, %s51
      %s69 = sphi 0, %s69
      %s71 = sphi 0, %s69
      %s72 = sphi 0, %s71
      %s86 = sphi 0, %s72
      %s90 = sphi 0, %s90
      %s92 = sphi 0, %s90
      %s93 = sphi 0, %s92
      %s107 = sphi 0, %s93
      %s111 = sphi 0, %s111
      %s113 = sphi 0, %s111
      %s114 = sphi 0, %s113
      %s128 = sphi 0, %s114
      %s134 = sphi 0, %s136
      %s137 = sphi 0, %s134
      %s138 = sphi 0, %s137
      %s154 = sphi 0, %s138
    $region4: #{tpu_custom_call.1} parent=1 // loop_header_branch
      %17 = sbr.rel (%p15) target = $region8
    $region5: #{tpu_custom_call.1} parent=1 // loop_body
      %s19 = ssub.s32 %s14, 1
      %s20 = ssub.s32 %s14, 2
      %s21 = sadd.s32 %s14, 1
      %s22 = ssub.s32 %s14, %s21
      %p23 = scmp.eq.s32.totalorder %s22, 0
      %s25 = sadd.s32 %s24, 1
      %s26 = scalar_select %p23, %s24, %s25
      %p29 = pneg %p23
      %p30 = scmp.eq.s32.totalorder %s14, 1
      %p31 = por %p29, %p30
      %p32 = scmp.ne.s32.totalorder %s24, %s27
      %p33 = scmp.eq.s32.totalorder %s14, 0
      %p34 = por %p32, %p33
      %p35 = scmp.ne.s32.totalorder %s24, %s27
      %p36 = scmp.eq.s32.totalorder %s19, 1
      %p37 = por %p35, %p36
      %p38 = scmp.ne.s32.totalorder %s27, %s28
      %p39 = scmp.eq.s32.totalorder %s19, 0
      %p40 = por %p38, %p39
      %p41 = scmp.ne.s32.totalorder %s27, %s28
      %p42 = scmp.eq.s32.totalorder %s20, 1
      %p43 = por %p41, %p42
      %p45 = scmp.ne.s32.totalorder %s28, %s44
      %p46 = scmp.eq.s32.totalorder %s20, 0
      %p47 = por %p45, %p46
      %s49 = sadd.s32 %s48, 1
      %p52 = scmp.eq.s32.totalorder %s14, 1
      %p53 = scmp.ne.s32.totalorder %s48, %s50
      %p54 = scmp.eq.s32.totalorder %s14, 0
      %p55 = por %p53, %p54
      %p56 = scmp.ne.s32.totalorder %s48, %s50
      %p57 = scmp.eq.s32.totalorder %s19, 1
      %p58 = por %p56, %p57
      %p59 = scmp.ne.s32.totalorder %s50, %s51
      %p60 = scmp.eq.s32.totalorder %s19, 0
      %p61 = por %p59, %p60
      %p62 = scmp.ne.s32.totalorder %s50, %s51
      %p63 = scmp.eq.s32.totalorder %s20, 1
      %p64 = por %p62, %p63
      %p66 = scmp.ne.s32.totalorder %s51, %s65
      %p67 = scmp.eq.s32.totalorder %s20, 0
      %p68 = por %p66, %p67
      %s70 = sadd.s32 %s69, 1
      %p73 = scmp.eq.s32.totalorder %s14, 1
      %p74 = scmp.ne.s32.totalorder %s69, %s71
      %p75 = scmp.eq.s32.totalorder %s14, 0
      %p76 = por %p74, %p75
      %p77 = scmp.ne.s32.totalorder %s69, %s71
      %p78 = scmp.eq.s32.totalorder %s19, 1
      %p79 = por %p77, %p78
      %p80 = scmp.ne.s32.totalorder %s71, %s72
      %p81 = scmp.eq.s32.totalorder %s19, 0
      %p82 = por %p80, %p81
      %p83 = scmp.ne.s32.totalorder %s71, %s72
      %p84 = scmp.eq.s32.totalorder %s20, 1
      %p85 = por %p83, %p84
      %p87 = scmp.ne.s32.totalorder %s72, %s86
      %p88 = scmp.eq.s32.totalorder %s20, 0
      %p89 = por %p87, %p88
      %s91 = sadd.s32 %s90, 1
      %p94 = scmp.eq.s32.totalorder %s14, 1
      %p95 = scmp.ne.s32.totalorder %s90, %s92
      %p96 = scmp.eq.s32.totalorder %s14, 0
      %p97 = por %p95, %p96
      %p98 = scmp.ne.s32.totalorder %s90, %s92
      %p99 = scmp.eq.s32.totalorder %s19, 1
      %p100 = por %p98, %p99
      %p101 = scmp.ne.s32.totalorder %s92, %s93
      %p102 = scmp.eq.s32.totalorder %s19, 0
      %p103 = por %p101, %p102
      %p104 = scmp.ne.s32.totalorder %s92, %s93
      %p105 = scmp.eq.s32.totalorder %s20, 1
      %p106 = por %p104, %p105
      %p108 = scmp.ne.s32.totalorder %s93, %s107
      %p109 = scmp.eq.s32.totalorder %s20, 0
      %p110 = por %p108, %p109
      %s112 = sadd.s32 %s111, 1
      %p115 = scmp.eq.s32.totalorder %s14, 1
      %p116 = scmp.ne.s32.totalorder %s111, %s113
      %p117 = scmp.eq.s32.totalorder %s14, 0
      %p118 = por %p116, %p117
      %p119 = scmp.ne.s32.totalorder %s111, %s113
      %p120 = scmp.eq.s32.totalorder %s19, 1
      %p121 = por %p119, %p120
      %p122 = scmp.ne.s32.totalorder %s113, %s114
      %p123 = scmp.eq.s32.totalorder %s19, 0
      %p124 = por %p122, %p123
      %p125 = scmp.ne.s32.totalorder %s113, %s114
      %p126 = scmp.eq.s32.totalorder %s20, 1
      %p127 = por %p125, %p126
      %p129 = scmp.ne.s32.totalorder %s114, %s128
      %p130 = scmp.eq.s32.totalorder %s20, 0
      %p131 = por %p129, %p130
      %s132 = ssub.s32 %s14, %s21
      %p133 = scmp.eq.s32.totalorder %s132, 0
      %s135 = sadd.s32 %s134, 1
      %s136 = scalar_select %p133, %s134, %s135
      %p139 = pneg %p133
      %p140 = scmp.eq.s32.totalorder %s14, 1
      %p141 = por %p139, %p140
      %p142 = scmp.ne.s32.totalorder %s134, %s137
      %p143 = scmp.eq.s32.totalorder %s14, 0
      %p144 = por %p142, %p143
      %p145 = scmp.ne.s32.totalorder %s134, %s137
      %p146 = scmp.eq.s32.totalorder %s19, 1
      %p147 = por %p145, %p146
      %p148 = scmp.ne.s32.totalorder %s137, %s138
      %p149 = scmp.eq.s32.totalorder %s19, 0
      %p150 = por %p148, %p149
      %p151 = scmp.ne.s32.totalorder %s137, %s138
      %p152 = scmp.eq.s32.totalorder %s20, 1
      %p153 = por %p151, %p152
      %p155 = scmp.ne.s32.totalorder %s138, %s154
      %p156 = scmp.eq.s32.totalorder %s20, 0
      %p157 = por %p155, %p156
      %p158 = scmp.le.s32.totalorder 1, %s14
      %p159 = scmp.lt.s32.totalorder %s14, 3
      %p160 = pnand %p158, %p159
      %p161 = pneg %p160
      // Predicated region
      $region9: #{tpu_custom_call.1} parent=5 // pred_check
        _
      $region10: #{tpu_custom_call.1} parent=5 // pred_check_branch
        %163 = sbr.rel (%p160) target = $region12
      $region11: #{tpu_custom_call.1} parent=5 // pred_region
        %s164 = ssub.s32 %s14, 1
        // Predicated region
        $region13: #{tpu_custom_call.1} parent=11 // pred_check
          %p165 = pneg %p61
        $region14: #{tpu_custom_call.1} parent=11 // pred_check_branch
          %167 = sbr.rel (%p165) target = $region16
        $region15: #{tpu_custom_call.1} parent=11 // pred_region
          _
        $region16: #{tpu_custom_call.1} parent=11 // pred_fallthru
          _
        // Predicated region
        $region17: #{tpu_custom_call.1} parent=11 // pred_check
          %p168 = pneg %p82
        $region18: #{tpu_custom_call.1} parent=11 // pred_check_branch
          %170 = sbr.rel (%p168) target = $region20
        $region19: #{tpu_custom_call.1} parent=11 // pred_region
          _
        $region20: #{tpu_custom_call.1} parent=11 // pred_fallthru
          _
        // Predicated region
        $region21: #{tpu_custom_call.1} parent=11 // pred_check
          %p171 = pneg %p103
        $region22: #{tpu_custom_call.1} parent=11 // pred_check_branch
          %173 = sbr.rel (%p171) target = $region24
        $region23: #{tpu_custom_call.1} parent=11 // pred_region
          _
        $region24: #{tpu_custom_call.1} parent=11 // pred_fallthru
          _
        // Predicated region
        $region25: #{tpu_custom_call.1} parent=11 // pred_check
          %p174 = pneg %p124
        $region26: #{tpu_custom_call.1} parent=11 // pred_check_branch
          %176 = sbr.rel (%p174) target = $region28
        $region27: #{tpu_custom_call.1} parent=11 // pred_region
          _
        $region28: #{tpu_custom_call.1} parent=11 // pred_fallthru
          _
      $region12: #{tpu_custom_call.1} parent=5 // pred_fallthru
        _
      %p177 = scmp.lt.s32.totalorder %s14, 2
      // Predicated region
      $region29: #{tpu_custom_call.1} parent=5 // pred_check
        %p178 = pneg %p177
      $region30: #{tpu_custom_call.1} parent=5 // pred_check_branch
        %180 = sbr.rel (%p178) target = $region32
      $region31: #{tpu_custom_call.1} parent=5 // pred_region
        // Predicated region
        $region33: #{tpu_custom_call.1} parent=31 // pred_check
          %p181 = pneg %p34
        $region34: #{tpu_custom_call.1} parent=31 // pred_check_branch
          %183 = sbr.rel (%p181) target = $region36
        $region35: #{tpu_custom_call.1} parent=31 // pred_region
          %p184 = scmp.lt.s32.totalorder %s14, 1
          %s185 = scalar_select %p184, %s14, 1
          %s186 = smul.addr %s185, 2
          %s187 = smul.addr %s186, 8
          %s188 = scalar_lea.vmem %s0, %s187
        $region36: #{tpu_custom_call.1} parent=31 // pred_fallthru
          _
      $region32: #{tpu_custom_call.1} parent=5 // pred_fallthru
        _
      %p189 = scmp.le.s32.totalorder 1, %s14
      %p190 = scmp.lt.s32.totalorder %s14, 3
      %p191 = pnand %p189, %p190
      %p192 = pneg %p191
      // Predicated region
      $region37: #{tpu_custom_call.1} parent=5 // pred_check
        _
      $region38: #{tpu_custom_call.1} parent=5 // pred_check_branch
        %194 = sbr.rel (%p191) target = $region40
      $region39: #{tpu_custom_call.1} parent=5 // pred_region
        %s195 = ssub.s32 %s14, 1
        %p196 = scmp.lt.s32.totalorder %s19, 1
        %s197 = scalar_select %p196, %s19, 1
        %s198 = smul.addr %s197, 2
        %s199 = smul.addr %s198, 8
        %s200 = scalar_lea.vmem %s0, %s199
        %p201 = pneg %p40
        %p202 = pneg %p37
        %p203 = pneg %p61
        %p204 = pneg %p58
        %p205 = pneg %p82
        %p206 = pneg %p79
        %p207 = pneg %p103
        %p208 = pneg %p100
        %p209 = pneg %p124
        %p210 = pneg %p121
        %p211 = pneg %p150
        %p212 = pneg %p147
        %s213 = sand.u32 %s137, 1
        %s214 = scalar_lea.sflag [#allocation3], %s213
        %s215 = sand.u32 %s137, 1
        %s216 = smul.addr %s215, 16
        %s217 = scalar_lea.vmem [#allocation2], %s216
        %p218 = scmp.lt.s32.totalorder %s19, 1
        %s219 = scalar_select %p218, %s19, 1
        %s220 = smul.addr %s219, 2
        %s221 = smul.addr %s220, 8
        %s222 = scalar_lea.vmem %s0, %s221
        %v223 = vld [vmem:[%s222] sm:$0xff]
        %v224 = vld [vmem:[%s222 + $0x8] sm:$0xff]
        %v225 = vlaneseq
        %v226 = vand.u32 %v225, 127
        %v227 = vadd.s32 %v226, 128
        %v228 = vshra.s32 %v226, 4
        %v229 = vshra.s32 %v227, 4
        %v230 = vand.u32 %v226, 15
        %v231 = vand.u32 %v227, 15
        %vm232 = vcmp.lt.s32.totalorder %v230, 2
        %vm233 = vcmp.lt.s32.totalorder %v231, 2
        %vm234 = vcmp.ge.s32.totalorder %v230, 14
        %vm235 = vcmp.ge.s32.totalorder %v231, 14
        %vm236 = vcmp.lt.s32.totalorder %v228, 2
        %vm237 = vcmp.lt.s32.totalorder %v229, 2
        %vm238 = vcmp.ge.s32.totalorder %v228, 14
        %vm239 = vcmp.ge.s32.totalorder %v229, 14
        %240 = vrot.lane.b32.xlu0 %v223, 116
        %v241 = vpop.permute.xlu0 %240
        %242 = vrot.lane.b32.xlu0 %v224, 116
        %v243 = vpop.permute.xlu0 %242
        %vm244 = vcmp.lt.s32.totalorder %v226, 116
        %v245 = vsel %vm244, %v241, %v243
        %v246 = vsel %vm244, %v243, %v241
        %247 = vrot.lane.b32.xlu0 %v223, 12
        %v248 = vpop.permute.xlu0 %247
        %249 = vrot.lane.b32.xlu0 %v224, 12
        %v250 = vpop.permute.xlu0 %249
        %vm251 = vcmp.lt.s32.totalorder %v226, 12
        %v252 = vsel %vm251, %v248, %v250
        %v253 = vsel %vm251, %v250, %v248
        %v254 = vsel %vm234, 1, 0
        %v255 = vsel %vm235, 1, 0
        %vm256 = vcmp.eq.s32.totalorder %v254, 1
        %vm257 = vcmp.eq.s32.totalorder %v255, 1
        %v258 = vsel %vm256, %v253, %v223
        %v259 = vsel %vm257, %v252, %v224
        %v260 = vsel %vm232, 1, 0
        %v261 = vsel %vm233, 1, 0
        %vm262 = vcmp.eq.s32.totalorder %v260, 1
        %vm263 = vcmp.eq.s32.totalorder %v261, 1
        %v264 = vsel %vm262, %v245, %v258
        %v265 = vsel %vm263, %v246, %v259
        %266 = vrot.lane.b32.xlu0 %v264, 64
        %v267 = vpop.permute.xlu0 %266
        %268 = vrot.lane.b32.xlu0 %v265, 64
        %v269 = vpop.permute.xlu0 %268
        %vm270 = vcmp.lt.s32.totalorder %v226, 64
        %v271 = vsel %vm270, %v267, %v269
        %v272 = vsel %vm270, %v269, %v267
        %v273 = vsel %vm238, 1, 0
        %v274 = vsel %vm239, 1, 0
        %vm275 = vcmp.eq.s32.totalorder %v273, 1
        %vm276 = vcmp.eq.s32.totalorder %v274, 1
        %v277 = vsel %vm275, %v271, %v264
        %v278 = vsel %vm276, %v272, %v265
        %v279 = vsel %vm236, 1, 0
        %v280 = vsel %vm237, 1, 0
        %vm281 = vcmp.eq.s32.totalorder %v279, 1
        %vm282 = vcmp.eq.s32.totalorder %v280, 1
        %v283 = vsel %vm281, %v272, %v277
        %v284 = vsel %vm282, %v271, %v278
        %v285 = vld [vmem:[%s4] sm:$0xff]
        %v286 = vld [vmem:[%s4 + $0x8] sm:$0xff]
        %v287 = vld [vmem:[%s4 + $0x10] sm:$0xff]
        %v288 = vld [vmem:[%s1] sm:$0xf]
        %290 = vset.pattern.permute.xlu0 0
        %291 = vperm.xlu0 %290, %v285
        %v292 = vpop.permute.xlu0 %291
        %vm294 = vcmask 64512
        %v296 = vsel %vm294, %v288, 0
        %298 = vmatprep.subr.mxu0 %v284
        %299 = vmatpush1.msra.mxu0 %v283
        %300 = vmatprep.subr.mxu0 0.0
        %301 = vmatpush1.msra.mxu0 0.0
        %302 = vmatprep.subr.mxu0 0.0
        %303 = vmatpush1.msra.mxu0 0.0
        %304 = vmatprep.subr.mxu0 0.0
        %305 = vmatpush1.msra.mxu0 0.0
        %306 = vmatprep.subr.mxu0 0.0
        %307 = vmatpush1.msra.mxu0 0.0
        %308 = vmatprep.subr.mxu0 0.0
        %309 = vmatpush1.msra.mxu0 0.0
        %310 = vmatprep.subr.mxu0 0.0
        %311 = vmatpush1.msra.mxu0 0.0
        %312 = vmatprep.subr.mxu0 0.0
        %313 = vmatpush1.msra.mxu0 0.0
        %314 = vmatprep.subr.mxu0 0.0
        %315 = vmatpush1.msra.mxu0 0.0
        %316 = vmatprep.subr.mxu0 0.0
        %317 = vmatpush1.msra.mxu0 0.0
        %318 = vmatprep.subr.mxu0 0.0
        %319 = vmatpush1.msra.mxu0 0.0
        %320 = vmatprep.subr.mxu0 0.0
        %321 = vmatpush1.msra.mxu0 0.0
        %322 = vmatprep.subr.mxu0 0.0
        %323 = vmatpush1.msra.mxu0 0.0
        %324 = vmatprep.subr.mxu0 0.0
        %325 = vmatpush1.msra.mxu0 0.0
        %326 = vmatprep.subr.mxu0 0.0
        %327 = vmatpush1.msra.mxu0 0.0
        %328 = vmatprep.subr.mxu0 0.0
        %329 = vmatpush1.msra.mxu0 0.0
        %330 = vmatprep.subr.mxu0 0.0
        %331 = vmatpush1.msra.mxu0 0.0
        %332 = vmatprep.subr.mxu0 0.0
        %333 = vmatpush1.msra.mxu0 0.0
        %334 = vmatprep.subr.mxu0 0.0
        %335 = vmatpush1.msra.mxu0 0.0
        %336 = vmatprep.subr.mxu0 0.0
        %337 = vmatpush1.msra.mxu0 0.0
        %338 = vmatprep.subr.mxu0 0.0
        %339 = vmatpush1.msra.mxu0 0.0
        %340 = vmatprep.subr.mxu0 0.0
        %341 = vmatpush1.msra.mxu0 0.0
        %342 = vmatprep.subr.mxu0 0.0
        %343 = vmatpush1.msra.mxu0 0.0
        %344 = vmatprep.subr.mxu0 0.0
        %345 = vmatpush1.msra.mxu0 0.0
        %346 = vmatprep.subr.mxu0 0.0
        %347 = vmatpush1.msra.mxu0 0.0
        %348 = vmatprep.subr.mxu0 0.0
        %349 = vmatpush1.msra.mxu0 0.0
        %350 = vmatprep.subr.mxu0 0.0
        %351 = vmatpush1.msra.mxu0 0.0
        %352 = vmatprep.subr.mxu0 0.0
        %353 = vmatpush1.msra.mxu0 0.0
        %354 = vmatprep.subr.mxu0 0.0
        %355 = vmatpush1.msra.mxu0 0.0
        %356 = vmatprep.subr.mxu0 0.0
        %357 = vmatpush1.msra.mxu0 0.0
        %358 = vmatprep.subr.mxu0 0.0
        %359 = vmatpush1.msra.mxu0 0.0
        %360 = vmatprep.subr.mxu0 0.0
        %361 = vmatpush1.msra.mxu0 0.0
        %362 = vmatprep.mubr.f32.mxu0 0.0
        %363 = vmatmul.mubr.f32.gmra.mrb[0].mxu0 %v296
        %v364 = vpop.f32.mrb[0].mxu0
        %v365 = vadd.f32 %v292, %v364
        %v366 = vpop.f32.mrb[0].mxu0
        %v367 = vadd.f32 %v292, %v366
        %368 = vdwg.mxu0
        %vm369 = vcmp.gt.f32.partialorder %v365, 0.0
        %vm370 = vcmp.gt.f32.partialorder %v367, 0.0
        %v373 = vrot.slane %v365, 4
        %v374 = vrot.slane %v367, 4
        %v377 = vmul.f32 %v292, %v373
        %v378 = vmul.f32 %v292, %v374
        %v381 = vrot.slane %v377, 4
        %v382 = vrot.slane %v378, 4
        %v385 = vsel %vm369, %v365, %v381
        %v386 = vsel %vm370, %v367, %v382
        %387 = vrot.lane.b32.xlu0 %v385, 17
        %v388 = vpop.permute.xlu0 %387
        %389 = vrot.lane.b32.xlu0 %v386, 17
        %v390 = vpop.permute.xlu0 %389
        %vm391 = vcmp.lt.s32.totalorder %v226, 17
        %v392 = vsel %vm391, %v388, %v390
        %v393 = vsel %vm391, %v390, %v388
        %vm394 = vcmp.ge.s32.totalorder %v228, 1
        %vm395 = vcmp.ge.s32.totalorder %v229, 1
        %vm396 = vcmp.ge.s32.totalorder %v230, 1
        %vm397 = vcmp.ge.s32.totalorder %v231, 1
        %vm398 = vmand %vm394, %vm396
        %vm399 = vmand %vm395, %vm397
        %v400 = vsel %vm398, 1, 0
        %v401 = vsel %vm399, 1, 0
        %vm402 = vcmp.eq.s32.totalorder %v400, 1
        %vm403 = vcmp.eq.s32.totalorder %v401, 1
        %v404 = vsel %vm402, %v393, 0.0
        %v405 = vsel %vm403, %v392, 0.0
        %406 = vrot.lane.b32.xlu0 %v385, 16
        %v407 = vpop.permute.xlu0 %406
        %408 = vrot.lane.b32.xlu0 %v386, 16
        %v409 = vpop.permute.xlu0 %408
        %vm410 = vcmp.lt.s32.totalorder %v226, 16
        %v411 = vsel %vm410, %v407, %v409
        %v412 = vsel %vm410, %v409, %v407
        %v413 = vsel %vm394, 1, 0
        %v414 = vsel %vm395, 1, 0
        %vm415 = vcmp.eq.s32.totalorder %v413, 1
        %vm416 = vcmp.eq.s32.totalorder %v414, 1
        %v417 = vsel %vm415, %v412, 0.0
        %v418 = vsel %vm416, %v411, 0.0
        %419 = vrot.lane.b32.xlu0 %v385, 15
        %v420 = vpop.permute.xlu0 %419
        %421 = vrot.lane.b32.xlu0 %v386, 15
        %v422 = vpop.permute.xlu0 %421
        %vm423 = vcmp.lt.s32.totalorder %v226, 15
        %v424 = vsel %vm423, %v420, %v422
        %v425 = vsel %vm423, %v422, %v420
        %vm426 = vcmp.lt.s32.totalorder %v230, 15
        %vm427 = vcmp.lt.s32.totalorder %v231, 15
        %vm428 = vmand %vm394, %vm426
        %vm429 = vmand %vm395, %vm427
        %v430 = vsel %vm428, 1, 0
        %v431 = vsel %vm429, 1, 0
        %vm432 = vcmp.eq.s32.totalorder %v430, 1
        %vm433 = vcmp.eq.s32.totalorder %v431, 1
        %v434 = vsel %vm432, %v425, 0.0
        %v435 = vsel %vm433, %v424, 0.0
        %436 = vrot.lane.b32.xlu0 %v385, 1
        %v437 = vpop.permute.xlu0 %436
        %438 = vrot.lane.b32.xlu0 %v386, 1
        %v439 = vpop.permute.xlu0 %438
        %vm440 = vcmp.lt.s32.totalorder %v226, 1
        %v441 = vsel %vm440, %v437, %v439
        %v442 = vsel %vm440, %v439, %v437
        %v443 = vsel %vm396, 1, 0
        %v444 = vsel %vm397, 1, 0
        %vm445 = vcmp.eq.s32.totalorder %v443, 1
        %vm446 = vcmp.eq.s32.totalorder %v444, 1
        %v447 = vsel %vm445, %v442, 0.0
        %v448 = vsel %vm446, %v441, 0.0
        %449 = vrot.lane.b32.xlu0 %v385, 127
        %v450 = vpop.permute.xlu0 %449
        %451 = vrot.lane.b32.xlu0 %v386, 127
        %v452 = vpop.permute.xlu0 %451
        %vm453 = vcmp.lt.s32.totalorder %v226, 127
        %v454 = vsel %vm453, %v450, %v452
        %v455 = vsel %vm453, %v452, %v450
        %v456 = vsel %vm426, 1, 0
        %v457 = vsel %vm427, 1, 0
        %vm458 = vcmp.eq.s32.totalorder %v456, 1
        %vm459 = vcmp.eq.s32.totalorder %v457, 1
        %v460 = vsel %vm458, %v454, 0.0
        %v461 = vsel %vm459, %v455, 0.0
        %462 = vrot.lane.b32.xlu0 %v385, 113
        %v463 = vpop.permute.xlu0 %462
        %464 = vrot.lane.b32.xlu0 %v386, 113
        %v465 = vpop.permute.xlu0 %464
        %vm466 = vcmp.lt.s32.totalorder %v226, 113
        %v467 = vsel %vm466, %v463, %v465
        %v468 = vsel %vm466, %v465, %v463
        %vm469 = vcmp.lt.s32.totalorder %v228, 15
        %vm470 = vcmp.lt.s32.totalorder %v229, 15
        %vm471 = vmand %vm469, %vm396
        %vm472 = vmand %vm470, %vm397
        %v473 = vsel %vm471, 1, 0
        %v474 = vsel %vm472, 1, 0
        %vm475 = vcmp.eq.s32.totalorder %v473, 1
        %vm476 = vcmp.eq.s32.totalorder %v474, 1
        %v477 = vsel %vm475, %v467, 0.0
        %v478 = vsel %vm476, %v468, 0.0
        %479 = vrot.lane.b32.xlu0 %v385, 112
        %v480 = vpop.permute.xlu0 %479
        %481 = vrot.lane.b32.xlu0 %v386, 112
        %v482 = vpop.permute.xlu0 %481
        %vm483 = vcmp.lt.s32.totalorder %v226, 112
        %v484 = vsel %vm483, %v480, %v482
        %v485 = vsel %vm483, %v482, %v480
        %v486 = vsel %vm469, 1, 0
        %v487 = vsel %vm470, 1, 0
        %vm488 = vcmp.eq.s32.totalorder %v486, 1
        %vm489 = vcmp.eq.s32.totalorder %v487, 1
        %v490 = vsel %vm488, %v484, 0.0
        %v491 = vsel %vm489, %v485, 0.0
        %492 = vrot.lane.b32.xlu0 %v385, 111
        %v493 = vpop.permute.xlu0 %492
        %494 = vrot.lane.b32.xlu0 %v386, 111
        %v495 = vpop.permute.xlu0 %494
        %vm496 = vcmp.lt.s32.totalorder %v226, 111
        %v497 = vsel %vm496, %v493, %v495
        %v498 = vsel %vm496, %v495, %v493
        %vm499 = vmand %vm469, %vm426
        %vm500 = vmand %vm470, %vm427
        %v501 = vsel %vm499, 1, 0
        %v502 = vsel %vm500, 1, 0
        %vm503 = vcmp.eq.s32.totalorder %v501, 1
        %vm504 = vcmp.eq.s32.totalorder %v502, 1
        %v505 = vsel %vm503, %v497, 0.0
        %v506 = vsel %vm504, %v498, 0.0
        %v509 = vrot.slane %v417, 4
        %v510 = vrot.slane %v418, 4
        %v515 = vrot.slane %v447, 4
        %v516 = vrot.slane %v448, 4
        %v521 = vrot.slane %v460, 4
        %v522 = vrot.slane %v461, 4
        %v527 = vrot.slane %v490, 4
        %v528 = vrot.slane %v491, 4
        %vm531 = vcmask 1043456
        %v532 = vsel %vm531, %v404, %v509
        %v533 = vsel %vm531, %v405, %v510
        %v534 = vsel %vm531, %v434, %v515
        %v535 = vsel %vm531, %v435, %v516
        %v536 = vsel %vm531, %v385, %v521
        %v537 = vsel %vm531, %v386, %v522
        %v538 = vsel %vm531, %v477, %v527
        %v539 = vsel %vm531, %v478, %v528
        %v540 = vld [vmem:[%s2] sm:$0xf]
        %542 = vset.pattern.permute.xlu0 0
        %543 = vperm.xlu0 %542, %v286
        %v544 = vpop.permute.xlu0 %543
        %vm546 = vcmask 293888
        %v548 = vsel %vm546, %v540, 0
        %v551 = vsel %vm531, %v505, 0
        %v554 = vsel %vm531, %v506, 0
        %556 = vmatprep.subr.mxu0 %v533
        %557 = vmatpush1.msra.mxu0 %v532
        %558 = vmatprep.subr.mxu0 %v535
        %559 = vmatpush1.msra.mxu0 %v534
        %560 = vmatprep.subr.mxu0 %v537
        %561 = vmatpush1.msra.mxu0 %v536
        %562 = vmatprep.subr.mxu0 %v539
        %563 = vmatpush1.msra.mxu0 %v538
        %564 = vmatprep.subr.mxu0 %v554
        %565 = vmatpush1.msra.mxu0 %v551
        %566 = vmatprep.subr.mxu0 0.0
        %567 = vmatpush1.msra.mxu0 0.0
        %568 = vmatprep.subr.mxu0 0.0
        %569 = vmatpush1.msra.mxu0 0.0
        %570 = vmatprep.subr.mxu0 0.0
        %571 = vmatpush1.msra.mxu0 0.0
        %572 = vmatprep.subr.mxu0 0.0
        %573 = vmatpush1.msra.mxu0 0.0
        %574 = vmatprep.subr.mxu0 0.0
        %575 = vmatpush1.msra.mxu0 0.0
        %576 = vmatprep.subr.mxu0 0.0
        %577 = vmatpush1.msra.mxu0 0.0
        %578 = vmatprep.subr.mxu0 0.0
        %579 = vmatpush1.msra.mxu0 0.0
        %580 = vmatprep.subr.mxu0 0.0
        %581 = vmatpush1.msra.mxu0 0.0
        %582 = vmatprep.subr.mxu0 0.0
        %583 = vmatpush1.msra.mxu0 0.0
        %584 = vmatprep.subr.mxu0 0.0
        %585 = vmatpush1.msra.mxu0 0.0
        %586 = vmatprep.subr.mxu0 0.0
        %587 = vmatpush1.msra.mxu0 0.0
        %588 = vmatprep.subr.mxu0 0.0
        %589 = vmatpush1.msra.mxu0 0.0
        %590 = vmatprep.subr.mxu0 0.0
        %591 = vmatpush1.msra.mxu0 0.0
        %592 = vmatprep.subr.mxu0 0.0
        %593 = vmatpush1.msra.mxu0 0.0
        %594 = vmatprep.subr.mxu0 0.0
        %595 = vmatpush1.msra.mxu0 0.0
        %596 = vmatprep.subr.mxu0 0.0
        %597 = vmatpush1.msra.mxu0 0.0
        %598 = vmatprep.subr.mxu0 0.0
        %599 = vmatpush1.msra.mxu0 0.0
        %600 = vmatprep.subr.mxu0 0.0
        %601 = vmatpush1.msra.mxu0 0.0
        %602 = vmatprep.subr.mxu0 0.0
        %603 = vmatpush1.msra.mxu0 0.0
        %604 = vmatprep.subr.mxu0 0.0
        %605 = vmatpush1.msra.mxu0 0.0
        %606 = vmatprep.subr.mxu0 0.0
        %607 = vmatpush1.msra.mxu0 0.0
        %608 = vmatprep.subr.mxu0 0.0
        %609 = vmatpush1.msra.mxu0 0.0
        %610 = vmatprep.subr.mxu0 0.0
        %611 = vmatpush1.msra.mxu0 0.0
        %612 = vmatprep.subr.mxu0 0.0
        %613 = vmatpush1.msra.mxu0 0.0
        %614 = vmatprep.subr.mxu0 0.0
        %615 = vmatpush1.msra.mxu0 0.0
        %616 = vmatprep.subr.mxu0 0.0
        %617 = vmatpush1.msra.mxu0 0.0
        %618 = vmatprep.subr.mxu0 0.0
        %619 = vmatpush1.msra.mxu0 0.0
        %620 = vmatprep.mubr.f32.mxu0 0.0
        %621 = vmatmul.mubr.f32.gmra.mrb[0].mxu0 %v548
        %v622 = vpop.f32.mrb[0].mxu0
        %v623 = vadd.f32 %v544, %v622
        %v624 = vpop.f32.mrb[0].mxu0
        %v625 = vadd.f32 %v544, %v624
        %626 = vdwg.mxu0
        %vm627 = vcmp.gt.f32.partialorder %v623, 0.0
        %vm628 = vcmp.gt.f32.partialorder %v625, 0.0
        %v631 = vrot.slane %v623, 4
        %v632 = vrot.slane %v625, 4
        %v635 = vmul.f32 %v544, %v631
        %v636 = vmul.f32 %v544, %v632
        %v639 = vrot.slane %v635, 4
        %v640 = vrot.slane %v636, 4
        %v643 = vsel %vm627, %v623, %v639
        %v644 = vsel %vm628, %v625, %v640
        %v645 = vld [vmem:[%s3] sm:$0xff]
        %647 = vset.pattern.permute.xlu0 0
        %648 = vperm.xlu0 %647, %v287
        %v649 = vpop.permute.xlu0 %648
        %vm651 = vcmask 31744
        %v653 = vsel %vm651, %v645, 0
        %v656 = vsel %vm531, %v643, 0
        %v659 = vsel %vm531, %v644, 0
        %661 = vmatprep.subr.mxu0 %v659
        %662 = vmatpush1.msra.mxu0 %v656
        %663 = vmatprep.subr.mxu0 0.0
        %664 = vmatpush1.msra.mxu0 0.0
        %665 = vmatprep.subr.mxu0 0.0
        %666 = vmatpush1.msra.mxu0 0.0
        %667 = vmatprep.subr.mxu0 0.0
        %668 = vmatpush1.msra.mxu0 0.0
        %669 = vmatprep.subr.mxu0 0.0
        %670 = vmatpush1.msra.mxu0 0.0
        %671 = vmatprep.subr.mxu0 0.0
        %672 = vmatpush1.msra.mxu0 0.0
        %673 = vmatprep.subr.mxu0 0.0
        %674 = vmatpush1.msra.mxu0 0.0
        %675 = vmatprep.subr.mxu0 0.0
        %676 = vmatpush1.msra.mxu0 0.0
        %677 = vmatprep.subr.mxu0 0.0
        %678 = vmatpush1.msra.mxu0 0.0
        %679 = vmatprep.subr.mxu0 0.0
        %680 = vmatpush1.msra.mxu0 0.0
        %681 = vmatprep.subr.mxu0 0.0
        %682 = vmatpush1.msra.mxu0 0.0
        %683 = vmatprep.subr.mxu0 0.0
        %684 = vmatpush1.msra.mxu0 0.0
        %685 = vmatprep.subr.mxu0 0.0
        %686 = vmatpush1.msra.mxu0 0.0
        %687 = vmatprep.subr.mxu0 0.0
        %688 = vmatpush1.msra.mxu0 0.0
        %689 = vmatprep.subr.mxu0 0.0
        %690 = vmatpush1.msra.mxu0 0.0
        %691 = vmatprep.subr.mxu0 0.0
        %692 = vmatpush1.msra.mxu0 0.0
        %693 = vmatprep.subr.mxu0 0.0
        %694 = vmatpush1.msra.mxu0 0.0
        %695 = vmatprep.subr.mxu0 0.0
        %696 = vmatpush1.msra.mxu0 0.0
        %697 = vmatprep.subr.mxu0 0.0
        %698 = vmatpush1.msra.mxu0 0.0
        %699 = vmatprep.subr.mxu0 0.0
        %700 = vmatpush1.msra.mxu0 0.0
        %701 = vmatprep.subr.mxu0 0.0
        %702 = vmatpush1.msra.mxu0 0.0
        %703 = vmatprep.subr.mxu0 0.0
        %704 = vmatpush1.msra.mxu0 0.0
        %705 = vmatprep.subr.mxu0 0.0
        %706 = vmatpush1.msra.mxu0 0.0
        %707 = vmatprep.subr.mxu0 0.0
        %708 = vmatpush1.msra.mxu0 0.0
        %709 = vmatprep.subr.mxu0 0.0
        %710 = vmatpush1.msra.mxu0 0.0
        %711 = vmatprep.subr.mxu0 0.0
        %712 = vmatpush1.msra.mxu0 0.0
        %713 = vmatprep.subr.mxu0 0.0
        %714 = vmatpush1.msra.mxu0 0.0
        %715 = vmatprep.subr.mxu0 0.0
        %716 = vmatpush1.msra.mxu0 0.0
        %717 = vmatprep.subr.mxu0 0.0
        %718 = vmatpush1.msra.mxu0 0.0
        %719 = vmatprep.subr.mxu0 0.0
        %720 = vmatpush1.msra.mxu0 0.0
        %721 = vmatprep.subr.mxu0 0.0
        %722 = vmatpush1.msra.mxu0 0.0
        %723 = vmatprep.subr.mxu0 0.0
        %724 = vmatpush1.msra.mxu0 0.0
        %725 = vmatprep.mubr.f32.mxu0 0.0
        %726 = vmatmul.mubr.f32.gmra.mrb[0].mxu0 %v653
        %v727 = vpop.f32.mrb[0].mxu0
        %v728 = vadd.f32 %v649, %v727
        %v729 = vpop.f32.mrb[0].mxu0
        %v730 = vadd.f32 %v649, %v729
        %731 = vdwg.mxu0
        %vm732 = vmor %vm236, %vm238
        %vm733 = vmor %vm237, %vm239
        %vm734 = vmor %vm732, %vm232
        %vm735 = vmor %vm733, %vm233
        %vm736 = vmor %vm734, %vm234
        %vm737 = vmor %vm735, %vm235
        %vm738 = vmxor %vm736, 1
        %vm739 = vmxor %vm737, 1
        %v740 = vadd.f32 %v223, %v728
        %v741 = vadd.f32 %v224, %v730
        %v742 = vsel %vm738, 1, 0
        %v743 = vsel %vm739, 1, 0
        %vm744 = vcmp.eq.s32.totalorder %v742, 1
        %vm745 = vcmp.eq.s32.totalorder %v743, 1
        %v746 = vsel %vm744, %v740, 0.0
        %v747 = vsel %vm745, %v741, 0.0
        %748 = vst [vmem:[%s217] sm:$0xff] %v746
        %749 = vst [vmem:[%s217 + $0x8] sm:$0xff] %v747
        %s750 = sand.u32 %s137, 1
        %s751 = scalar_lea.sflag [#allocation3], %s750
        %s752 = sand.u32 %s137, 1
        %s753 = smul.addr %s752, 16
        %s754 = scalar_lea.vmem [#allocation2], %s753
        // Predicated region
        $region41: #{tpu_custom_call.1} parent=39 // pred_check
          %p755 = pneg %p147
        $region42: #{tpu_custom_call.1} parent=39 // pred_check_branch
          %757 = sbr.rel (%p755) target = $region44
        $region43: #{tpu_custom_call.1} parent=39 // pred_region
          %s759 = ssub.s32 256, 256
          %760 = vsyncadd %s751, %s759
          %s761 = smul.addr %s19, 2
          %s762 = smul.addr %s761, 128
          %s763 = scalar_lea.hbm %s5, %s762
          %s765 = sshll.u32 %s754, 4
          %s766 = int_to_ptr.vmem [resolvable:$true] %s765
          %768 = dma.vmem_to_hbm [thread:$0]  %s766, 256, %s763, %s751
        $region44: #{tpu_custom_call.1} parent=39 // pred_fallthru
          _
      $region40: #{tpu_custom_call.1} parent=5 // pred_fallthru
        _
      %p769 = scmp.le.s32.totalorder 2, %s14
      // Predicated region
      $region45: #{tpu_custom_call.1} parent=5 // pred_check
        %p770 = pneg %p769
      $region46: #{tpu_custom_call.1} parent=5 // pred_check_branch
        %772 = sbr.rel (%p770) target = $region48
      $region47: #{tpu_custom_call.1} parent=5 // pred_region
        %s773 = ssub.s32 %s14, 2
        // Predicated region
        $region49: #{tpu_custom_call.1} parent=47 // pred_check
          %p774 = pneg %p153
        $region50: #{tpu_custom_call.1} parent=47 // pred_check_branch
          %776 = sbr.rel (%p774) target = $region52
        $region51: #{tpu_custom_call.1} parent=47 // pred_region
          %s777 = sand.u32 %s138, 1
          %s778 = scalar_lea.sflag [#allocation3], %s777
          %s779 = sand.u32 %s138, 1
          %s780 = smul.addr %s779, 16
          %s781 = scalar_lea.vmem [#allocation2], %s780
          %782 = dma.done %s778, 256
        $region52: #{tpu_custom_call.1} parent=47 // pred_fallthru
          _
      $region48: #{tpu_custom_call.1} parent=5 // pred_fallthru
        _
    $region6: #{tpu_custom_call.1} parent=1 // loop_footer
      %s18 = sadd.s32 1, %s14
    $region7: #{tpu_custom_call.1} parent=1 // loop_footer_branch
      %13 = sbr.rel target = $region3
    $region8: #{tpu_custom_call.1} parent=1 // loop_exit
      _
    %783 = vsyncpa [#allocation3], 1
    %s784 = scalar_lea.sflag [#allocation3], 1
    %785 = vsyncpa %s784, 1

</llo_original>
